<compile_context>
chip_gen: v7x
topology: tpu7x:2x2x1
jax: 0.10.0
libtpu: 0.0.40
codegen_flags: <defaults>
</compile_context>

<pallas_src>
import jax
import jax.numpy as jnp
from jax.experimental import pallas as pl
from jax.experimental.pallas import tpu as pltpu


# ---------------------------------------------------------------------------
# in-kernel math helpers (f32)
# ---------------------------------------------------------------------------
def _erf(x):
    # Abramowitz & Stegun 7.1.26 rational approximation (~1.5e-7 abs err).
    p = 0.3275911
    a1, a2, a3, a4, a5 = 0.254829592, -0.284496736, 1.421413741, -1.453152027, 1.061405429
    s = jnp.where(x >= 0.0, 1.0, -1.0)
    z = jnp.abs(x)
    t = pl.reciprocal(1.0 + p * z)  # exact reciprocal: keeps full erf accuracy, still one EUP op
    poly = ((((a5 * t + a4) * t + a3) * t + a2) * t + a1) * t
    return s * (1.0 - poly * jnp.exp(-z * z))


def _gelu_exact(x):
    # PyTorch nn.GELU() default (approximate='none'): 0.5*x*(1+erf(x/sqrt(2)))
    return 0.5 * x * (1.0 + _erf(x * 0.7071067811865476))


# ---------------------------------------------------------------------------
# generation-aware sizing
# ---------------------------------------------------------------------------
def _vmem_capacity_bytes():
    try:
        return int(pltpu.get_tpu_info().vmem_capacity_bytes)
    except Exception:
        return 128 << 20  # conservative default (v5e/v6e)


def _pick_batch_block(B, Tq, C, vmem_cap_bytes):
    """Batch elements per grid step.

    Hard invariant: the row block Rb = Bb*Tq is a multiple of Tq (every block starts
    at a batch-element boundary, required by the conv left-padding masks).  Prefers
    Rb a multiple of 8 sublanes, a block in the ~256-2048-row band (smallest in band
    -> most grid steps for DMA/compute overlap and v7x megacore sharding), and a
    generation-aware VMEM activation budget.
    """
    act_budget = min(vmem_cap_bytes // 4, 24 << 20)   # ~16 MiB on v7x, 24 MiB on v5e/v6e
    per_row = 72 * C                                  # ~bytes of live activations per output row
    divs = [d for d in range(1, B + 1) if B % d == 0]
    cands = [d for d in divs if (d * Tq) % 8 == 0 or d == B]
    fitting = [d for d in cands if d * Tq * per_row <= act_budget]
    if not fitting:
        # TODO(synk): within-batch halo tiling when a single batch element overflows VMEM.
        fitting = [min(cands)]
    in_band = [d for d in fitting if 256 <= d * Tq <= 2048]
    if in_band:
        return min(in_band)                           # smallest block in band -> >= 8 steps typically
    below = [d for d in fitting if d * Tq < 256]
    if below:
        multi = [d for d in below if B // d >= 2]     # keep >= 2 steps for v7x if possible
        return max(multi) if multi else max(below)
    return min(fitting)


# ---------------------------------------------------------------------------
# wrapper: builds specs, stacks weights, calls the fused kernel
# ---------------------------------------------------------------------------
def temporal_downsampler(x, params):
    """x: [B, T, C] -> [B, T//4, C] (T must be divisible by 4)."""
    B, T, C = x.shape
    assert T % 4 == 0, "TemporalDownsampler kernel assumes T divisible by 4"
    Tq = T // 4

    vmem_cap = _vmem_capacity_bytes()
    Bb = _pick_batch_block(B, Tq, C, vmem_cap)
    Rb = Bb * Tq                                      # rows per grid step (1 row = 1 output step)
    assert B % Bb == 0 and Rb % Tq == 0               # batch-boundary invariant for the masks
    vmem_limit = int(min(48 << 20, (vmem_cap * 5) // 8))   # 40 MiB on v7x, 48 MiB on v5e/v6e

    # Stack the 3 conv taps along the contraction dim: rows [W_0; W_1; W_2],
    # W_k = weight[:, :, k].T  (PyTorch Conv1d weight layout is [C_out, C_in, K]).
    def stack_w(w):
        return jnp.concatenate([w[:, :, k].T for k in range(3)], axis=0).astype(jnp.bfloat16)

    w1s = stack_w(params["w1"])                       # (3C, C) bf16
    w2s = stack_w(params["w2"])                       # (3C, C) bf16
    b1 = params["b1"].reshape(1, C).astype(jnp.float32)
    b2 = params["b2"].reshape(1, C).astype(jnp.float32)
    gamma = params["gamma"].reshape(1, C).astype(jnp.float32)
    beta = params["beta"].reshape(1, C).astype(jnp.float32)

    # Free, contiguous reshape: row r = (b, s) holds x[b, 4s:4s+4, :] on the lane axis.
    # bf16 input is accepted as-is (halves the dominant HBM read on this mem-bound op).
    x4 = x.reshape(B * Tq, 4 * C)

    def kernel(x_ref, w1_ref, b1_ref, w2_ref, b2_ref, g_ref, bt_ref, o_ref):
        xb = x_ref[...].astype(jnp.bfloat16)          # (Rb, 4C); no-op cast for bf16 input

        # rows that are the first output step of a batch element (left zero padding)
        first = (jax.lax.broadcasted_iota(jnp.int32, (Rb, 1), 0) % Tq) == 0

        def prev_row(v):
            # result[r] = v[r-1]; zero at every batch-element boundary.  pltpu.roll runs
            # on the otherwise-idle XLU slot; the wrap-around at row 0 is killed by `first`.
            return jnp.where(first, 0.0, pltpu.roll(v, shift=1, axis=0))

        w1 = w1_ref[...]                              # (3C, C) = [W1_0; W1_1; W1_2]
        b1v = jnp.broadcast_to(b1_ref[...], (Rb, C))  # hoisted once, reused for both parities

        # conv1 (stride 2, pad 1).  Row r=(b,s) holds x[4s:4s+4] on lanes.
        #   even outputs t=2s   read x[4s-1], x[4s  ], x[4s+1]
        #   odd  outputs t=2s+1 read x[4s+1], x[4s+2], x[4s+3]
        pe12 = jnp.dot(xb[:, :2 * C], w1[C:, :], preferred_element_type=jnp.float32)  # taps 1,2
        pe0 = jnp.dot(xb[:, 3 * C:], w1[:C, :], preferred_element_type=jnp.float32)   # tap 0 (prev row)
        h_e = _gelu_exact(prev_row(pe0) + pe12 + b1v)
        h_o = _gelu_exact(jnp.dot(xb[:, C:], w1, preferred_element_type=jnp.float32) + b1v)

        # conv2 (stride 2, pad 1): output s reads h[2s-1], h[2s], h[2s+1]
        #                                        = h_o[s-1], h_e[s], h_o[s]
        he = h_e.astype(jnp.bfloat16)
        ho = h_o.astype(jnp.bfloat16)
        w2 = w2_ref[...]
        q0 = jnp.dot(ho, w2[:C, :], preferred_element_type=jnp.float32)       # tap 0 (prev row)
        q1 = jnp.dot(he, w2[C:2 * C, :], preferred_element_type=jnp.float32)  # tap 1
        q2 = jnp.dot(ho, w2[2 * C:, :], preferred_element_type=jnp.float32)   # tap 2
        y = prev_row(q0) + q1 + q2 + b2_ref[...]

        # LayerNorm over channels (biased variance, eps = 1e-5), one-pass moments, f32
        mu = jnp.mean(y, axis=-1, keepdims=True)
        var = jnp.mean(y * y, axis=-1, keepdims=True) - mu * mu
        yn = (y - mu) * jax.lax.rsqrt(var + 1e-5)
        o_ref[...] = (yn * g_ref[...] + bt_ref[...]).astype(o_ref.dtype)

    const_map = lambda i: (0, 0)
    single_buf = pl.Buffered(1)                       # constant blocks: no double-buffering needed

    out2d = pl.pallas_call(
        kernel,
        out_shape=jax.ShapeDtypeStruct((B * Tq, C), x.dtype),
        grid=(B // Bb,),
        in_specs=[
            pl.BlockSpec((Rb, 4 * C), lambda i: (i, 0)),                        # x rows (default 2-deep buffer)
            pl.BlockSpec((3 * C, C), const_map, pipeline_mode=single_buf),      # conv1 W
            pl.BlockSpec((1, C), const_map, pipeline_mode=single_buf),          # conv1 b
            pl.BlockSpec((3 * C, C), const_map, pipeline_mode=single_buf),      # conv2 W
            pl.BlockSpec((1, C), const_map, pipeline_mode=single_buf),          # conv2 b
            pl.BlockSpec((1, C), const_map, pipeline_mode=single_buf),          # LN gamma
            pl.BlockSpec((1, C), const_map, pipeline_mode=single_buf),          # LN beta
        ],
        out_specs=pl.BlockSpec((Rb, C), lambda i: (i, 0)),
        compiler_params=pltpu.CompilerParams(
            dimension_semantics=("parallel",),
            vmem_limit_bytes=vmem_limit,
        ),
    )(x4, w1s, b1, w2s, b2, gamma, beta)

    return out2d.reshape(B, Tq, C)


# ---------------------------------------------------------------------------
# pure-JAX reference (exact f32, matches the PyTorch module)
# ---------------------------------------------------------------------------
def _ref_forward(x, p):
    xc = jnp.transpose(x, (0, 2, 1))  # NCH

    def conv(z, w, b):
        y = jax.lax.conv_general_dilated(
            z, w, window_strides=(2,), padding=((1, 1),),
            dimension_numbers=("NCH", "OIH", "NCH"))
        return y + b[None, :, None]

    h = conv(xc, p["w1"], p["b1"])
    h = jax.nn.gelu(h, approximate=False)
    h = conv(h, p["w2"], p["b2"])
    y = jnp.transpose(h, (0, 2, 1))
    mu = y.mean(-1, keepdims=True)
    var = ((y - mu) ** 2).mean(-1, keepdims=True)
    return (y - mu) / jnp.sqrt(var + 1e-5) * p["gamma"] + p["beta"]


if __name__ == "__main__":
    B, T, d_model = 2, 16, 32

    key = jax.random.PRNGKey(0)
    k_x, k_w1, k_b1, k_w2, k_b2 = jax.random.split(key, 5)

    x = jax.random.normal(k_x, (B, T, d_model), dtype=jnp.float32)
    params = {
        # Conv1d weights in PyTorch layout [C_out, C_in, K]
        "w1": 0.1 * jax.random.normal(k_w1, (d_model, d_model, 3), dtype=jnp.float32),
        "b1": 0.1 * jax.random.normal(k_b1, (d_model,), dtype=jnp.float32),
        "w2": 0.1 * jax.random.normal(k_w2, (d_model, d_model, 3), dtype=jnp.float32),
        "b2": 0.1 * jax.random.normal(k_b2, (d_model,), dtype=jnp.float32),
        # LayerNorm params at their PyTorch init values
        "gamma": jnp.ones((d_model,), jnp.float32),
        "beta": jnp.zeros((d_model,), jnp.float32),
    }

    out = temporal_downsampler(x, params)
    out = jax.block_until_ready(out)
    assert out.shape == (B, T // 4, d_model), out.shape

    ref = jax.block_until_ready(_ref_forward(x, params))
    # Tolerance accounts for intentional bf16 matmul inputs (f32 accumulation);
    # the exact-f32 path agrees to ~1e-6.
    err = float(jnp.max(jnp.abs(out - ref)))
    assert jnp.allclose(out, ref, atol=3e-2, rtol=3e-2), err

    print("KERNEL_OK")
</pallas_src>

<mosaic_0001>
module attributes {stable_mosaic.version = 11 : i64} {
  func.func @kernel(%arg0: i32, %arg1: memref<8x128xf32, #tpu.memory_space<vmem>>, %arg2: memref<96x32xbf16, #tpu.memory_space<vmem>>, %arg3: memref<1x32xf32, #tpu.memory_space<vmem>>, %arg4: memref<96x32xbf16, #tpu.memory_space<vmem>>, %arg5: memref<1x32xf32, #tpu.memory_space<vmem>>, %arg6: memref<1x32xf32, #tpu.memory_space<vmem>>, %arg7: memref<1x32xf32, #tpu.memory_space<vmem>>, %arg8: memref<8x32xf32, #tpu.memory_space<vmem>>) attributes {dimension_semantics = [#tpu.dimension_semantics<parallel>], iteration_bounds = array<i64: 1>, scalar_prefetch = 0 : i64, scratch_operands = 0 : i64, tpu.core_type = #tpu.core_type<tc>, window_params = [{transform_indices = @transform_0, window_bounds = array<i64: 8, 128>}, {pipeline_mode = #tpu.pipeline_mode<synchronous>, transform_indices = @transform_1, window_bounds = array<i64: 96, 32>}, {pipeline_mode = #tpu.pipeline_mode<synchronous>, transform_indices = @transform_2, window_bounds = array<i64: 1, 32>}, {pipeline_mode = #tpu.pipeline_mode<synchronous>, transform_indices = @transform_3, window_bounds = array<i64: 96, 32>}, {pipeline_mode = #tpu.pipeline_mode<synchronous>, transform_indices = @transform_4, window_bounds = array<i64: 1, 32>}, {pipeline_mode = #tpu.pipeline_mode<synchronous>, transform_indices = @transform_5, window_bounds = array<i64: 1, 32>}, {pipeline_mode = #tpu.pipeline_mode<synchronous>, transform_indices = @transform_6, window_bounds = array<i64: 1, 32>}, {transform_indices = @transform_7, window_bounds = array<i64: 8, 32>}]} {
    %c0 = arith.constant 0 : index
    %c0_0 = arith.constant 0 : index
    %0 = vector.load %arg1[%c0, %c0_0] : memref<8x128xf32, #tpu.memory_space<vmem>>, vector<8x128xf32>
    %1 = arith.truncf %0 : vector<8x128xf32> to vector<8x128xbf16>
    %2 = tpu.iota {dimensions = array<i32: 0>} : vector<8x1xi32>
    %c4_i32 = arith.constant 4 : i32
    %c0_i32 = arith.constant 0 : i32
    %3 = arith.cmpi eq, %c4_i32, %c0_i32 : i32
    %c1_i32 = arith.constant 1 : i32
    %4 = arith.select %3, %c1_i32, %c4_i32 : i32
    %5 = vector.broadcast %4 : i32 to vector<8x1xi32>
    %6 = arith.remsi %2, %5 : vector<8x1xi32>
    %c0_i32_1 = arith.constant 0 : i32
    %7 = vector.broadcast %c0_i32_1 : i32 to vector<8x1xi32>
    %8 = arith.cmpi ne, %6, %7 : vector<8x1xi32>
    %c0_i32_2 = arith.constant 0 : i32
    %9 = vector.broadcast %c0_i32_2 : i32 to vector<8x1xi32>
    %10 = arith.cmpi slt, %6, %9 : vector<8x1xi32>
    %c0_i32_3 = arith.constant 0 : i32
    %11 = arith.cmpi slt, %4, %c0_i32_3 : i32
    %12 = vector.broadcast %11 : i1 to vector<8x1xi1>
    %13 = vector.broadcast %12 : vector<8x1xi1> to vector<8x1xi1>
    %14 = arith.xori %10, %13 : vector<8x1xi1>
    %15 = arith.andi %14, %8 : vector<8x1xi1>
    %16 = vector.broadcast %4 : i32 to vector<8x1xi32>
    %17 = arith.addi %6, %16 : vector<8x1xi32>
    %18 = arith.select %15, %17, %6 : vector<8x1xi1>, vector<8x1xi32>
    %c0_i32_4 = arith.constant 0 : i32
    %19 = vector.broadcast %c0_i32_4 : i32 to vector<8x1xi32>
    %20 = arith.cmpi eq, %18, %19 : vector<8x1xi32>
    %c0_5 = arith.constant 0 : index
    %c0_6 = arith.constant 0 : index
    %21 = vector.load %arg2[%c0_5, %c0_6] : memref<96x32xbf16, #tpu.memory_space<vmem>>, vector<96x32xbf16>
    %c0_7 = arith.constant 0 : index
    %c0_8 = arith.constant 0 : index
    %22 = vector.load %arg3[%c0_7, %c0_8] : memref<1x32xf32, #tpu.memory_space<vmem>>, vector<1x32xf32>
    %23 = vector.shape_cast %22 : vector<1x32xf32> to vector<1x32xf32>
    %24 = vector.broadcast %23 : vector<1x32xf32> to vector<8x32xf32>
    %25 = vector.extract_strided_slice %1 {offsets = [0, 0], sizes = [8, 64], strides = [1, 1]} : vector<8x128xbf16> to vector<8x64xbf16>
    %26 = vector.extract_strided_slice %21 {offsets = [32, 0], sizes = [64, 32], strides = [1, 1]} : vector<96x32xbf16> to vector<64x32xbf16>
    %cst = arith.constant dense<0.000000e+00> : vector<8x32xf32>
    %27 = tpu.matmul %25, %26, %cst {dimension_numbers = #tpu.dot_dimension_numbers<[1], [0], [0], [1], [0, 0, 1, 1], [], []>} : vector<8x64xbf16>, vector<64x32xbf16>, vector<8x32xf32> -> vector<8x32xf32>
    %28 = vector.extract_strided_slice %1 {offsets = [0, 96], sizes = [8, 32], strides = [1, 1]} : vector<8x128xbf16> to vector<8x32xbf16>
    %29 = vector.extract_strided_slice %21 {offsets = [0, 0], sizes = [32, 32], strides = [1, 1]} : vector<96x32xbf16> to vector<32x32xbf16>
    %cst_9 = arith.constant dense<0.000000e+00> : vector<8x32xf32>
    %30 = tpu.matmul %28, %29, %cst_9 {dimension_numbers = #tpu.dot_dimension_numbers<[1], [0], [0], [1], [0, 0, 1, 1], [], []>} : vector<8x32xbf16>, vector<32x32xbf16>, vector<8x32xf32> -> vector<8x32xf32>
    %c1_i32_10 = arith.constant 1 : i32
    %31 = tpu.dynamic_rotate %30 by %c1_i32_10 dim 0 : vector<8x32xf32>, i32 -> vector<8x32xf32>
    %cst_11 = arith.constant 0.000000e+00 : f32
    %32 = vector.shape_cast %20 : vector<8x1xi1> to vector<8x1xi1>
    %33 = vector.broadcast %32 : vector<8x1xi1> to vector<8x32xi1>
    %34 = vector.broadcast %cst_11 : f32 to vector<8x32xf32>
    %35 = arith.select %33, %34, %31 : vector<8x32xi1>, vector<8x32xf32>
    %36 = arith.addf %35, %27 : vector<8x32xf32>
    %37 = arith.addf %36, %24 : vector<8x32xf32>
    %cst_12 = arith.constant 5.000000e-01 : f32
    %38 = vector.broadcast %cst_12 : f32 to vector<8x32xf32>
    %39 = arith.mulf %38, %37 : vector<8x32xf32>
    %cst_13 = arith.constant 0.707106769 : f32
    %40 = vector.broadcast %cst_13 : f32 to vector<8x32xf32>
    %41 = arith.mulf %37, %40 : vector<8x32xf32>
    %cst_14 = arith.constant 0.000000e+00 : f32
    %42 = vector.broadcast %cst_14 : f32 to vector<8x32xf32>
    %43 = arith.cmpf oge, %41, %42 : vector<8x32xf32>
    %cst_15 = arith.constant 1.000000e+00 : f32
    %cst_16 = arith.constant -1.000000e+00 : f32
    %44 = vector.broadcast %cst_15 : f32 to vector<8x32xf32>
    %45 = vector.broadcast %cst_16 : f32 to vector<8x32xf32>
    %46 = arith.select %43, %44, %45 : vector<8x32xi1>, vector<8x32xf32>
    %47 = math.absf %41 : vector<8x32xf32>
    %cst_17 = arith.constant 0.327591091 : f32
    %48 = vector.broadcast %cst_17 : f32 to vector<8x32xf32>
    %49 = arith.mulf %48, %47 : vector<8x32xf32>
    %cst_18 = arith.constant 1.000000e+00 : f32
    %50 = vector.broadcast %cst_18 : f32 to vector<8x32xf32>
    %51 = arith.addf %50, %49 : vector<8x32xf32>
    %52 = tpu.reciprocal %51 : vector<8x32xf32> -> vector<8x32xf32>
    %cst_19 = arith.constant 1.06140542 : f32
    %53 = vector.broadcast %cst_19 : f32 to vector<8x32xf32>
    %54 = arith.mulf %53, %52 : vector<8x32xf32>
    %cst_20 = arith.constant -1.45315206 : f32
    %55 = vector.broadcast %cst_20 : f32 to vector<8x32xf32>
    %56 = arith.addf %54, %55 : vector<8x32xf32>
    %57 = arith.mulf %56, %52 : vector<8x32xf32>
    %cst_21 = arith.constant 1.42141378 : f32
    %58 = vector.broadcast %cst_21 : f32 to vector<8x32xf32>
    %59 = arith.addf %57, %58 : vector<8x32xf32>
    %60 = arith.mulf %59, %52 : vector<8x32xf32>
    %cst_22 = arith.constant -0.284496725 : f32
    %61 = vector.broadcast %cst_22 : f32 to vector<8x32xf32>
    %62 = arith.addf %60, %61 : vector<8x32xf32>
    %63 = arith.mulf %62, %52 : vector<8x32xf32>
    %cst_23 = arith.constant 0.254829586 : f32
    %64 = vector.broadcast %cst_23 : f32 to vector<8x32xf32>
    %65 = arith.addf %63, %64 : vector<8x32xf32>
    %66 = arith.mulf %65, %52 : vector<8x32xf32>
    %cst_24 = arith.constant 0.000000e+00 : f32
    %67 = vector.broadcast %cst_24 : f32 to vector<8x32xf32>
    %68 = arith.subf %67, %47 : vector<8x32xf32>
    %69 = arith.mulf %68, %47 : vector<8x32xf32>
    %70 = math.exp %69 : vector<8x32xf32>
    %71 = arith.mulf %66, %70 : vector<8x32xf32>
    %cst_25 = arith.constant 1.000000e+00 : f32
    %72 = vector.broadcast %cst_25 : f32 to vector<8x32xf32>
    %73 = arith.subf %72, %71 : vector<8x32xf32>
    %74 = arith.mulf %46, %73 : vector<8x32xf32>
    %cst_26 = arith.constant 1.000000e+00 : f32
    %75 = vector.broadcast %cst_26 : f32 to vector<8x32xf32>
    %76 = arith.addf %75, %74 : vector<8x32xf32>
    %77 = arith.mulf %39, %76 : vector<8x32xf32>
    %78 = vector.extract_strided_slice %1 {offsets = [0, 32], sizes = [8, 96], strides = [1, 1]} : vector<8x128xbf16> to vector<8x96xbf16>
    %cst_27 = arith.constant dense<0.000000e+00> : vector<8x32xf32>
    %79 = tpu.matmul %78, %21, %cst_27 {dimension_numbers = #tpu.dot_dimension_numbers<[1], [0], [0], [1], [0, 0, 1, 1], [], []>} : vector<8x96xbf16>, vector<96x32xbf16>, vector<8x32xf32> -> vector<8x32xf32>
    %80 = arith.addf %79, %24 : vector<8x32xf32>
    %cst_28 = arith.constant 5.000000e-01 : f32
    %81 = vector.broadcast %cst_28 : f32 to vector<8x32xf32>
    %82 = arith.mulf %81, %80 : vector<8x32xf32>
    %cst_29 = arith.constant 0.707106769 : f32
    %83 = vector.broadcast %cst_29 : f32 to vector<8x32xf32>
    %84 = arith.mulf %80, %83 : vector<8x32xf32>
    %cst_30 = arith.constant 0.000000e+00 : f32
    %85 = vector.broadcast %cst_30 : f32 to vector<8x32xf32>
    %86 = arith.cmpf oge, %84, %85 : vector<8x32xf32>
    %cst_31 = arith.constant 1.000000e+00 : f32
    %cst_32 = arith.constant -1.000000e+00 : f32
    %87 = vector.broadcast %cst_31 : f32 to vector<8x32xf32>
    %88 = vector.broadcast %cst_32 : f32 to vector<8x32xf32>
    %89 = arith.select %86, %87, %88 : vector<8x32xi1>, vector<8x32xf32>
    %90 = math.absf %84 : vector<8x32xf32>
    %cst_33 = arith.constant 0.327591091 : f32
    %91 = vector.broadcast %cst_33 : f32 to vector<8x32xf32>
    %92 = arith.mulf %91, %90 : vector<8x32xf32>
    %cst_34 = arith.constant 1.000000e+00 : f32
    %93 = vector.broadcast %cst_34 : f32 to vector<8x32xf32>
    %94 = arith.addf %93, %92 : vector<8x32xf32>
    %95 = tpu.reciprocal %94 : vector<8x32xf32> -> vector<8x32xf32>
    %cst_35 = arith.constant 1.06140542 : f32
    %96 = vector.broadcast %cst_35 : f32 to vector<8x32xf32>
    %97 = arith.mulf %96, %95 : vector<8x32xf32>
    %cst_36 = arith.constant -1.45315206 : f32
    %98 = vector.broadcast %cst_36 : f32 to vector<8x32xf32>
    %99 = arith.addf %97, %98 : vector<8x32xf32>
    %100 = arith.mulf %99, %95 : vector<8x32xf32>
    %cst_37 = arith.constant 1.42141378 : f32
    %101 = vector.broadcast %cst_37 : f32 to vector<8x32xf32>
    %102 = arith.addf %100, %101 : vector<8x32xf32>
    %103 = arith.mulf %102, %95 : vector<8x32xf32>
    %cst_38 = arith.constant -0.284496725 : f32
    %104 = vector.broadcast %cst_38 : f32 to vector<8x32xf32>
    %105 = arith.addf %103, %104 : vector<8x32xf32>
    %106 = arith.mulf %105, %95 : vector<8x32xf32>
    %cst_39 = arith.constant 0.254829586 : f32
    %107 = vector.broadcast %cst_39 : f32 to vector<8x32xf32>
    %108 = arith.addf %106, %107 : vector<8x32xf32>
    %109 = arith.mulf %108, %95 : vector<8x32xf32>
    %cst_40 = arith.constant 0.000000e+00 : f32
    %110 = vector.broadcast %cst_40 : f32 to vector<8x32xf32>
    %111 = arith.subf %110, %90 : vector<8x32xf32>
    %112 = arith.mulf %111, %90 : vector<8x32xf32>
    %113 = math.exp %112 : vector<8x32xf32>
    %114 = arith.mulf %109, %113 : vector<8x32xf32>
    %cst_41 = arith.constant 1.000000e+00 : f32
    %115 = vector.broadcast %cst_41 : f32 to vector<8x32xf32>
    %116 = arith.subf %115, %114 : vector<8x32xf32>
    %117 = arith.mulf %89, %116 : vector<8x32xf32>
    %cst_42 = arith.constant 1.000000e+00 : f32
    %118 = vector.broadcast %cst_42 : f32 to vector<8x32xf32>
    %119 = arith.addf %118, %117 : vector<8x32xf32>
    %120 = arith.mulf %82, %119 : vector<8x32xf32>
    %121 = arith.truncf %77 : vector<8x32xf32> to vector<8x32xbf16>
    %122 = arith.truncf %120 : vector<8x32xf32> to vector<8x32xbf16>
    %c0_43 = arith.constant 0 : index
    %c0_44 = arith.constant 0 : index
    %123 = vector.load %arg4[%c0_43, %c0_44] : memref<96x32xbf16, #tpu.memory_space<vmem>>, vector<96x32xbf16>
    %124 = vector.extract_strided_slice %123 {offsets = [0, 0], sizes = [32, 32], strides = [1, 1]} : vector<96x32xbf16> to vector<32x32xbf16>
    %cst_45 = arith.constant dense<0.000000e+00> : vector<8x32xf32>
    %125 = tpu.matmul %122, %124, %cst_45 {dimension_numbers = #tpu.dot_dimension_numbers<[1], [0], [0], [1], [0, 0, 1, 1], [], []>} : vector<8x32xbf16>, vector<32x32xbf16>, vector<8x32xf32> -> vector<8x32xf32>
    %126 = vector.extract_strided_slice %123 {offsets = [32, 0], sizes = [32, 32], strides = [1, 1]} : vector<96x32xbf16> to vector<32x32xbf16>
    %cst_46 = arith.constant dense<0.000000e+00> : vector<8x32xf32>
    %127 = tpu.matmul %121, %126, %cst_46 {dimension_numbers = #tpu.dot_dimension_numbers<[1], [0], [0], [1], [0, 0, 1, 1], [], []>} : vector<8x32xbf16>, vector<32x32xbf16>, vector<8x32xf32> -> vector<8x32xf32>
    %128 = vector.extract_strided_slice %123 {offsets = [64, 0], sizes = [32, 32], strides = [1, 1]} : vector<96x32xbf16> to vector<32x32xbf16>
    %cst_47 = arith.constant dense<0.000000e+00> : vector<8x32xf32>
    %129 = tpu.matmul %122, %128, %cst_47 {dimension_numbers = #tpu.dot_dimension_numbers<[1], [0], [0], [1], [0, 0, 1, 1], [], []>} : vector<8x32xbf16>, vector<32x32xbf16>, vector<8x32xf32> -> vector<8x32xf32>
    %c1_i32_48 = arith.constant 1 : i32
    %130 = tpu.dynamic_rotate %125 by %c1_i32_48 dim 0 : vector<8x32xf32>, i32 -> vector<8x32xf32>
    %cst_49 = arith.constant 0.000000e+00 : f32
    %131 = vector.shape_cast %20 : vector<8x1xi1> to vector<8x1xi1>
    %132 = vector.broadcast %131 : vector<8x1xi1> to vector<8x32xi1>
    %133 = vector.broadcast %cst_49 : f32 to vector<8x32xf32>
    %134 = arith.select %132, %133, %130 : vector<8x32xi1>, vector<8x32xf32>
    %135 = arith.addf %134, %127 : vector<8x32xf32>
    %136 = arith.addf %135, %129 : vector<8x32xf32>
    %c0_50 = arith.constant 0 : index
    %c0_51 = arith.constant 0 : index
    %137 = vector.load %arg5[%c0_50, %c0_51] : memref<1x32xf32, #tpu.memory_space<vmem>>, vector<1x32xf32>
    %138 = vector.broadcast %137 : vector<1x32xf32> to vector<8x32xf32>
    %139 = arith.addf %136, %138 : vector<8x32xf32>
    %cst_52 = arith.constant dense<0.000000e+00> : vector<8xf32>
    %140 = vector.multi_reduction <add>, %139, %cst_52 [1] : vector<8x32xf32> to vector<8xf32>
    %141 = vector.shape_cast %140 : vector<8xf32> to vector<8x1xf32>
    %cst_53 = arith.constant 3.200000e+01 : f32
    %142 = vector.broadcast %cst_53 : f32 to vector<8x1xf32>
    %143 = arith.divf %141, %142 : vector<8x1xf32>
    %144 = arith.mulf %139, %139 : vector<8x32xf32>
    %cst_54 = arith.constant dense<0.000000e+00> : vector<8xf32>
    %145 = vector.multi_reduction <add>, %144, %cst_54 [1] : vector<8x32xf32> to vector<8xf32>
    %146 = vector.shape_cast %145 : vector<8xf32> to vector<8x1xf32>
    %cst_55 = arith.constant 3.200000e+01 : f32
    %147 = vector.broadcast %cst_55 : f32 to vector<8x1xf32>
    %148 = arith.divf %146, %147 : vector<8x1xf32>
    %149 = arith.mulf %143, %143 : vector<8x1xf32>
    %150 = arith.subf %148, %149 : vector<8x1xf32>
    %151 = vector.broadcast %143 : vector<8x1xf32> to vector<8x32xf32>
    %152 = arith.subf %139, %151 : vector<8x32xf32>
    %cst_56 = arith.constant 9.99999974E-6 : f32
    %153 = vector.broadcast %cst_56 : f32 to vector<8x1xf32>
    %154 = arith.addf %150, %153 : vector<8x1xf32>
    %155 = math.rsqrt %154 : vector<8x1xf32>
    %156 = vector.broadcast %155 : vector<8x1xf32> to vector<8x32xf32>
    %157 = arith.mulf %152, %156 : vector<8x32xf32>
    %c0_57 = arith.constant 0 : index
    %c0_58 = arith.constant 0 : index
    %158 = vector.load %arg6[%c0_57, %c0_58] : memref<1x32xf32, #tpu.memory_space<vmem>>, vector<1x32xf32>
    %159 = vector.broadcast %158 : vector<1x32xf32> to vector<8x32xf32>
    %160 = arith.mulf %157, %159 : vector<8x32xf32>
    %c0_59 = arith.constant 0 : index
    %c0_60 = arith.constant 0 : index
    %161 = vector.load %arg7[%c0_59, %c0_60] : memref<1x32xf32, #tpu.memory_space<vmem>>, vector<1x32xf32>
    %162 = vector.broadcast %161 : vector<1x32xf32> to vector<8x32xf32>
    %163 = arith.addf %160, %162 : vector<8x32xf32>
    %c0_61 = arith.constant 0 : index
    %c0_62 = arith.constant 0 : index
    %164 = vector.load %arg8[%c0_61, %c0_62] : memref<8x32xf32, #tpu.memory_space<vmem>>, vector<8x32xf32>
    tpu.vector_store %arg8[%c0_61, %c0_62], %163 {strides = array<i32>} : memref<8x32xf32, #tpu.memory_space<vmem>>, vector<8x32xf32>,
    return
  }
  func.func @transform_0(%arg0: i32) -> (i32, i32) {
    %c0_i32 = arith.constant 0 : i32
    %c0_i32_0 = arith.constant 0 : i32
    return %arg0, %c0_i32 : i32, i32
  }
  func.func @transform_1(%arg0: i32) -> (i32, i32) {
    %c0_i32 = arith.constant 0 : i32
    %c0_i32_0 = arith.constant 0 : i32
    %c0_i32_1 = arith.constant 0 : i32
    return %c0_i32, %c0_i32_0 : i32, i32
  }
  func.func @transform_2(%arg0: i32) -> (i32, i32) {
    %c0_i32 = arith.constant 0 : i32
    %c0_i32_0 = arith.constant 0 : i32
    %c0_i32_1 = arith.constant 0 : i32
    return %c0_i32, %c0_i32_0 : i32, i32
  }
  func.func @transform_3(%arg0: i32) -> (i32, i32) {
    %c0_i32 = arith.constant 0 : i32
    %c0_i32_0 = arith.constant 0 : i32
    %c0_i32_1 = arith.constant 0 : i32
    return %c0_i32, %c0_i32_0 : i32, i32
  }
  func.func @transform_4(%arg0: i32) -> (i32, i32) {
    %c0_i32 = arith.constant 0 : i32
    %c0_i32_0 = arith.constant 0 : i32
    %c0_i32_1 = arith.constant 0 : i32
    return %c0_i32, %c0_i32_0 : i32, i32
  }
  func.func @transform_5(%arg0: i32) -> (i32, i32) {
    %c0_i32 = arith.constant 0 : i32
    %c0_i32_0 = arith.constant 0 : i32
    %c0_i32_1 = arith.constant 0 : i32
    return %c0_i32, %c0_i32_0 : i32, i32
  }
  func.func @transform_6(%arg0: i32) -> (i32, i32) {
    %c0_i32 = arith.constant 0 : i32
    %c0_i32_0 = arith.constant 0 : i32
    %c0_i32_1 = arith.constant 0 : i32
    return %c0_i32, %c0_i32_0 : i32, i32
  }
  func.func @transform_7(%arg0: i32) -> (i32, i32) {
    %c0_i32 = arith.constant 0 : i32
    %c0_i32_0 = arith.constant 0 : i32
    return %arg0, %c0_i32 : i32, i32
  }
}

</mosaic_0001>

<llo_original>
// kernel: tpu_custom_call.1
$region0: #{tpu_custom_call.1}
  #allocation0 [shape = 'u32[]', space=smem, size = 0x4, offset = 0x4, fixed_abs, tag = 'smem constant byte address 0x4 - core index']
  #allocation1 [shape = 'u32[144,128]{1,0:T(1,128)}', space=vmem, size = 0x12000, scoped, tag = 'internal scratch']
  %s0 = inlined_call_operand.vmem [shape: f32[8,128], index: 0, kind: input, shape index: {}]
  %s1 = inlined_call_operand.vmem [shape: bf16[96,32], index: 1, kind: input, shape index: {}]
  %s2 = inlined_call_operand.vmem [shape: f32[1,32], index: 2, kind: input, shape index: {}]
  %s3 = inlined_call_operand.vmem [shape: bf16[96,32], index: 3, kind: input, shape index: {}]
  %s4 = inlined_call_operand.vmem [shape: f32[1,32], index: 4, kind: input, shape index: {}]
  %s5 = inlined_call_operand.vmem [shape: f32[1,32], index: 5, kind: input, shape index: {}]
  %s6 = inlined_call_operand.vmem [shape: f32[1,32], index: 6, kind: input, shape index: {}]
  %s7 = inlined_call_operand.hbm [shape: f32[8,32], index: 7, kind: output, shape index: {}]
  %s8 = sld [smem:[#allocation0]]
  $region38: #{tpu_custom_call.1} parent=0
    _
  %s10 = ssub.s32 1, %s8
  %s11 = scalar_select 0, %s10, %s8
  $region1: #{tpu_custom_call.1} parent=0
    #allocation2 [shape = 'u8[4096]{0}', space=vmem, size = 0x1000, scoped, tag = 'output window, operand 0, single buffered']
    #allocation3 [shape = 's32[1]{0}', space=sflag, size = 0x4, scoped, tag = 'scoped memory for tpu_custom_call.1']
    %12 = vsyncpa [#allocation3], 0
    // Predicated region
    $region2: #{tpu_custom_call.1} parent=1 // pred_check
      _
    $region3: #{tpu_custom_call.1} parent=1 // pred_check_branch
      %14 = sbr.rel (0) target = $region5
    $region4: #{tpu_custom_call.1} parent=1 // pred_region
      _
    $region5: #{tpu_custom_call.1} parent=1 // pred_fallthru
      _
    // Predicated region
    $region6: #{tpu_custom_call.1} parent=1 // pred_check
      _
    $region7: #{tpu_custom_call.1} parent=1 // pred_check_branch
      %16 = sbr.rel (0) target = $region9
    $region8: #{tpu_custom_call.1} parent=1 // pred_region
      _
    $region9: #{tpu_custom_call.1} parent=1 // pred_fallthru
      _
    // Predicated region
    $region10: #{tpu_custom_call.1} parent=1 // pred_check
      _
    $region11: #{tpu_custom_call.1} parent=1 // pred_check_branch
      %18 = sbr.rel (0) target = $region13
    $region12: #{tpu_custom_call.1} parent=1 // pred_region
      _
    $region13: #{tpu_custom_call.1} parent=1 // pred_fallthru
      _
    // Predicated region
    $region14: #{tpu_custom_call.1} parent=1 // pred_check
      _
    $region15: #{tpu_custom_call.1} parent=1 // pred_check_branch
      %20 = sbr.rel (0) target = $region17
    $region16: #{tpu_custom_call.1} parent=1 // pred_region
      _
    $region17: #{tpu_custom_call.1} parent=1 // pred_fallthru
      _
    // Predicated region
    $region18: #{tpu_custom_call.1} parent=1 // pred_check
      _
    $region19: #{tpu_custom_call.1} parent=1 // pred_check_branch
      %22 = sbr.rel (0) target = $region21
    $region20: #{tpu_custom_call.1} parent=1 // pred_region
      _
    $region21: #{tpu_custom_call.1} parent=1 // pred_fallthru
      _
    // Predicated region
    $region22: #{tpu_custom_call.1} parent=1 // pred_check
      _
    $region23: #{tpu_custom_call.1} parent=1 // pred_check_branch
      %24 = sbr.rel (0) target = $region25
    $region24: #{tpu_custom_call.1} parent=1 // pred_region
      _
    $region25: #{tpu_custom_call.1} parent=1 // pred_fallthru
      _
    // Predicated region
    $region26: #{tpu_custom_call.1} parent=1 // pred_check
      _
    $region27: #{tpu_custom_call.1} parent=1 // pred_check_branch
      %26 = sbr.rel (0) target = $region29
    $region28: #{tpu_custom_call.1} parent=1 // pred_region
      _
    $region29: #{tpu_custom_call.1} parent=1 // pred_fallthru
      _
    %v28 = vld [vmem:[%s0] sm:$0xff]
    %v29 = vpack.c.bf16 %v28, %v28
    %v30 = vlaneseq
    %v31 = vshrl.u32 %v30, 7
    %vm32 = vcmp.lt.s32.totalorder %v31, 0
    %v33 = vsub.s32 0, %v31
    %v34 = vsel %vm32, %v33, %v31
    %v35 = vshrl.u32 %v34, 2
    %v36 = vand.u32 %v34, 3
    %v37 = vsub.s32 0, %v36
    %v38 = vsel %vm32, %v37, %v36
    %vm39 = vcmp.ne.s32.totalorder %v38, 0
    %vm40 = vcmp.lt.s32.totalorder %v38, 0
    %vm41 = vmand %vm40, %vm39
    %v42 = vadd.s32 %v38, 4
    %v43 = vsel %vm41, %v42, %v38
    %vm44 = vcmp.eq.s32.totalorder %v43, 0
    %v45 = vld [vmem:[%s1] sm:$0xf]
    %v46 = vld [vmem:[%s1 + $0x4] sm:$0xf]
    %v47 = vld [vmem:[%s1 + $0x8] sm:$0xf]
    %v48 = vld [vmem:[%s1 + $0xc] sm:$0xf]
    %v49 = vld [vmem:[%s1 + $0x10] sm:$0xf]
    %v50 = vld [vmem:[%s1 + $0x14] sm:$0xf]
    %v51 = vld [vmem:[%s1 + $0x18] sm:$0xf]
    %v52 = vld [vmem:[%s1 + $0x1c] sm:$0xf]
    %v53 = vld [vmem:[%s1 + $0x20] sm:$0xf]
    %v54 = vld [vmem:[%s1 + $0x24] sm:$0xf]
    %v55 = vld [vmem:[%s1 + $0x28] sm:$0xf]
    %v56 = vld [vmem:[%s1 + $0x2c] sm:$0xf]
    %v57 = vld [vmem:[%s2] sm:$0x1]
    %v59 = vlaneseq
    %v60 = vshrl.u32 %v59, 7
    %v61 = vsub.s32 0, %v60
    %v62 = vrot.slane %v57, %v61
    %v72 = vunpack.c.l.b16 %v49
    %v73 = vunpack.c.l.b16 %v50
    %v74 = vunpack.c.l.b16 %v51
    %v75 = vunpack.c.l.b16 %v52
    %v76 = vunpack.c.l.b16 %v53
    %v77 = vunpack.c.l.b16 %v54
    %v78 = vunpack.c.l.b16 %v55
    %v79 = vunpack.c.l.b16 %v56
    %v80 = vpack.c.b16 %v73, %v72
    %v81 = vpack.c.b16 %v75, %v74
    %v82 = vpack.c.b16 %v77, %v76
    %v83 = vpack.c.b16 %v79, %v78
    %vm88 = vcmask 523264
    %v90 = vsel %vm88, %v29, 0
    %92 = vmatprep.subr.bf16.mxu0 0
    %93 = vmatpush1.bf16.msra.mxu0 %v80
    %94 = vmatprep.subr.bf16.mxu0 0
    %95 = vmatpush1.bf16.msra.mxu0 %v81
    %96 = vmatprep.subr.bf16.mxu0 0
    %97 = vmatpush1.bf16.msra.mxu0 %v82
    %98 = vmatprep.subr.bf16.mxu0 0
    %99 = vmatpush1.bf16.msra.mxu0 %v83
    %100 = vmatprep.subr.bf16.mxu0 0
    %101 = vmatpush1.bf16.msra.mxu0 0
    %102 = vmatprep.subr.bf16.mxu0 0
    %103 = vmatpush1.bf16.msra.mxu0 0
    %104 = vmatprep.subr.bf16.mxu0 0
    %105 = vmatpush1.bf16.msra.mxu0 0
    %106 = vmatprep.subr.bf16.mxu0 0
    %107 = vmatpush1.bf16.msra.mxu0 0
    %108 = vmatprep.subr.bf16.mxu0 0
    %109 = vmatpush1.bf16.msra.mxu0 0
    %110 = vmatprep.subr.bf16.mxu0 0
    %111 = vmatpush1.bf16.msra.mxu0 0
    %112 = vmatprep.subr.bf16.mxu0 0
    %113 = vmatpush1.bf16.msra.mxu0 0
    %114 = vmatprep.subr.bf16.mxu0 0
    %115 = vmatpush1.bf16.msra.mxu0 0
    %116 = vmatprep.subr.bf16.mxu0 0
    %117 = vmatpush1.bf16.msra.mxu0 0
    %118 = vmatprep.subr.bf16.mxu0 0
    %119 = vmatpush1.bf16.msra.mxu0 0
    %120 = vmatprep.subr.bf16.mxu0 0
    %121 = vmatpush1.bf16.msra.mxu0 0
    %122 = vmatprep.subr.bf16.mxu0 0
    %123 = vmatpush1.bf16.msra.mxu0 0
    %124 = vmatprep.mubr.bf16.mxu0 0
    %125 = vmatmul.mubr.bf16.gmra.mrb[0].mxu0 %v90
    %v126 = vpop.f32.mrb[0].mxu0
    %v127 = vadd.f32 0.0, %v126
    %v128 = vpop.f32.mrb[0].mxu0
    %v129 = vpop.f32.mrb[0].mxu0
    %v130 = vpop.f32.mrb[0].mxu0
    %131 = vdwg.mxu0
    %133 = vrot.lane.b32.xlu0 %v29, 32
    %v134 = vpop.permute.xlu0 %133
    %v139 = vunpack.c.l.b16 %v45
    %v140 = vunpack.c.l.b16 %v46
    %v141 = vunpack.c.l.b16 %v47
    %v142 = vunpack.c.l.b16 %v48
    %v143 = vpack.c.b16 %v140, %v139
    %v144 = vpack.c.b16 %v142, %v141
    %vm147 = vcmask 261120
    %v149 = vsel %vm147, %v134, 0
    %151 = vmatprep.subr.bf16.mxu0 0
    %152 = vmatpush1.bf16.msra.mxu0 %v143
    %153 = vmatprep.subr.bf16.mxu0 0
    %154 = vmatpush1.bf16.msra.mxu0 %v144
    %155 = vmatprep.subr.bf16.mxu0 0
    %156 = vmatpush1.bf16.msra.mxu0 0
    %157 = vmatprep.subr.bf16.mxu0 0
    %158 = vmatpush1.bf16.msra.mxu0 0
    %159 = vmatprep.subr.bf16.mxu0 0
    %160 = vmatpush1.bf16.msra.mxu0 0
    %161 = vmatprep.subr.bf16.mxu0 0
    %162 = vmatpush1.bf16.msra.mxu0 0
    %163 = vmatprep.subr.bf16.mxu0 0
    %164 = vmatpush1.bf16.msra.mxu0 0
    %165 = vmatprep.subr.bf16.mxu0 0
    %166 = vmatpush1.bf16.msra.mxu0 0
    %167 = vmatprep.subr.bf16.mxu0 0
    %168 = vmatpush1.bf16.msra.mxu0 0
    %169 = vmatprep.subr.bf16.mxu0 0
    %170 = vmatpush1.bf16.msra.mxu0 0
    %171 = vmatprep.subr.bf16.mxu0 0
    %172 = vmatpush1.bf16.msra.mxu0 0
    %173 = vmatprep.subr.bf16.mxu0 0
    %174 = vmatpush1.bf16.msra.mxu0 0
    %175 = vmatprep.subr.bf16.mxu0 0
    %176 = vmatpush1.bf16.msra.mxu0 0
    %177 = vmatprep.subr.bf16.mxu0 0
    %178 = vmatpush1.bf16.msra.mxu0 0
    %179 = vmatprep.subr.bf16.mxu0 0
    %180 = vmatpush1.bf16.msra.mxu0 0
    %181 = vmatprep.subr.bf16.mxu0 0
    %182 = vmatpush1.bf16.msra.mxu0 0
    %183 = vmatprep.mubr.bf16.mxu0 0
    %184 = vmatmul.mubr.bf16.gmra.mrb[0].mxu0 %v149
    %v185 = vpop.f32.mrb[0].mxu0
    %v186 = vadd.f32 0.0, %v185
    %v187 = vpop.f32.mrb[0].mxu0
    %v188 = vpop.f32.mrb[0].mxu0
    %v189 = vpop.f32.mrb[0].mxu0
    %190 = vdwg.mxu0
    %v191 = vrot.slane %v186, 7
    %v192 = vsel %vm44, 1, 0
    %vm193 = vcmp.eq.s32.totalorder %v192, 1
    %v194 = vsel %vm193, 0.0, %v191
    %v195 = vadd.f32 %v194, %v127
    %v196 = vadd.f32 %v195, %v62
    %v197 = vmul.f32 %v196, 0.5
    %v198 = vmul.f32 %v196, 0.70710677
    %vm199 = vcmp.ge.f32.partialorder %v198, 0.0
    %v200 = vsel %vm199, 1.0, -1.0
    %v201 = vand.u32 2147483647, %v198
    %v202 = vmul.f32 %v201, 0.3275911
    %v203 = vadd.f32 %v202, 1.0
    %v204 = vrcp.pop %v203
    %v205 = vmul.f32 %v204, 1.0614054
    %v206 = vadd.f32 %v205, -1.4531521
    %v207 = vmul.f32 %v206, %v204
    %v208 = vadd.f32 %v207, 1.4214138
    %v209 = vmul.f32 %v208, %v204
    %v210 = vadd.f32 %v209, -0.28449672
    %v211 = vmul.f32 %v210, %v204
    %v212 = vadd.f32 %v211, 0.2548296
    %v213 = vmul.f32 %v212, %v204
    %v214 = vsub.f32 0.0, %v201
    %v215 = vmul.f32 %v214, %v201
    %v216 = vmul.f32 %v215, 1.442695
    %v217 = vpow.pop %v216
    %v218 = vmul.f32 %v213, %v217
    %v219 = vsub.f32 1.0, %v218
    %v220 = vmul.f32 %v200, %v219
    %v221 = vadd.f32 %v220, 1.0
    %v222 = vmul.f32 %v197, %v221
    %223 = vrot.lane.b32.xlu0 %v29, 96
    %v224 = vpop.permute.xlu0 %223
    %vm225 = vcmask 785408
    %v227 = vsel %vm225, %v224, 0
    %229 = vmatprep.subr.bf16.mxu0 0
    %230 = vmatpush1.bf16.msra.mxu0 %v143
    %231 = vmatprep.subr.bf16.mxu0 0
    %232 = vmatpush1.bf16.msra.mxu0 %v144
    %233 = vmatprep.subr.bf16.mxu0 0
    %234 = vmatpush1.bf16.msra.mxu0 %v80
    %235 = vmatprep.subr.bf16.mxu0 0
    %236 = vmatpush1.bf16.msra.mxu0 %v81
    %237 = vmatprep.subr.bf16.mxu0 0
    %238 = vmatpush1.bf16.msra.mxu0 %v82
    %239 = vmatprep.subr.bf16.mxu0 0
    %240 = vmatpush1.bf16.msra.mxu0 %v83
    %241 = vmatprep.subr.bf16.mxu0 0
    %242 = vmatpush1.bf16.msra.mxu0 0
    %243 = vmatprep.subr.bf16.mxu0 0
    %244 = vmatpush1.bf16.msra.mxu0 0
    %245 = vmatprep.subr.bf16.mxu0 0
    %246 = vmatpush1.bf16.msra.mxu0 0
    %247 = vmatprep.subr.bf16.mxu0 0
    %248 = vmatpush1.bf16.msra.mxu0 0
    %249 = vmatprep.subr.bf16.mxu0 0
    %250 = vmatpush1.bf16.msra.mxu0 0
    %251 = vmatprep.subr.bf16.mxu0 0
    %252 = vmatpush1.bf16.msra.mxu0 0
    %253 = vmatprep.subr.bf16.mxu0 0
    %254 = vmatpush1.bf16.msra.mxu0 0
    %255 = vmatprep.subr.bf16.mxu0 0
    %256 = vmatpush1.bf16.msra.mxu0 0
    %257 = vmatprep.subr.bf16.mxu0 0
    %258 = vmatpush1.bf16.msra.mxu0 0
    %259 = vmatprep.subr.bf16.mxu0 0
    %260 = vmatpush1.bf16.msra.mxu0 0
    %261 = vmatprep.mubr.bf16.mxu0 0
    %262 = vmatmul.mubr.bf16.gmra.mrb[0].mxu0 %v227
    %v263 = vpop.f32.mrb[0].mxu0
    %v264 = vadd.f32 %v62, %v263
    %v265 = vpop.f32.mrb[0].mxu0
    %v266 = vpop.f32.mrb[0].mxu0
    %v267 = vpop.f32.mrb[0].mxu0
    %268 = vdwg.mxu0
    %v269 = vmul.f32 %v264, 0.5
    %v270 = vmul.f32 %v264, 0.70710677
    %vm271 = vcmp.ge.f32.partialorder %v270, 0.0
    %v272 = vsel %vm271, 1.0, -1.0
    %v273 = vand.u32 2147483647, %v270
    %v274 = vmul.f32 %v273, 0.3275911
    %v275 = vadd.f32 %v274, 1.0
    %v276 = vrcp.pop %v275
    %v277 = vmul.f32 %v276, 1.0614054
    %v278 = vadd.f32 %v277, -1.4531521
    %v279 = vmul.f32 %v278, %v276
    %v280 = vadd.f32 %v279, 1.4214138
    %v281 = vmul.f32 %v280, %v276
    %v282 = vadd.f32 %v281, -0.28449672
    %v283 = vmul.f32 %v282, %v276
    %v284 = vadd.f32 %v283, 0.2548296
    %v285 = vmul.f32 %v284, %v276
    %v286 = vsub.f32 0.0, %v273
    %v287 = vmul.f32 %v286, %v273
    %v288 = vmul.f32 %v287, 1.442695
    %v289 = vpow.pop %v288
    %v290 = vmul.f32 %v285, %v289
    %v291 = vsub.f32 1.0, %v290
    %v292 = vmul.f32 %v272, %v291
    %v293 = vadd.f32 %v292, 1.0
    %v294 = vmul.f32 %v269, %v293
    %v295 = vpack.c.bf16 %v222, %v222
    %v296 = vpack.c.bf16 %v294, %v294
    %v297 = vld [vmem:[%s3] sm:$0xf]
    %v298 = vld [vmem:[%s3 + $0x4] sm:$0xf]
    %v299 = vld [vmem:[%s3 + $0x8] sm:$0xf]
    %v300 = vld [vmem:[%s3 + $0xc] sm:$0xf]
    %v301 = vld [vmem:[%s3 + $0x10] sm:$0xf]
    %v302 = vld [vmem:[%s3 + $0x14] sm:$0xf]
    %v303 = vld [vmem:[%s3 + $0x18] sm:$0xf]
    %v304 = vld [vmem:[%s3 + $0x1c] sm:$0xf]
    %v305 = vld [vmem:[%s3 + $0x20] sm:$0xf]
    %v306 = vld [vmem:[%s3 + $0x24] sm:$0xf]
    %v307 = vld [vmem:[%s3 + $0x28] sm:$0xf]
    %v308 = vld [vmem:[%s3 + $0x2c] sm:$0xf]
    %v313 = vunpack.c.l.b16 %v297
    %v314 = vunpack.c.l.b16 %v298
    %v315 = vunpack.c.l.b16 %v299
    %v316 = vunpack.c.l.b16 %v300
    %v317 = vpack.c.b16 %v314, %v313
    %v318 = vpack.c.b16 %v316, %v315
    %v322 = vsel %vm147, %v296, 0
    %324 = vmatprep.subr.bf16.mxu0 0
    %325 = vmatpush1.bf16.msra.mxu0 %v317
    %326 = vmatprep.subr.bf16.mxu0 0
    %327 = vmatpush1.bf16.msra.mxu0 %v318
    %328 = vmatprep.subr.bf16.mxu0 0
    %329 = vmatpush1.bf16.msra.mxu0 0
    %330 = vmatprep.subr.bf16.mxu0 0
    %331 = vmatpush1.bf16.msra.mxu0 0
    %332 = vmatprep.subr.bf16.mxu0 0
    %333 = vmatpush1.bf16.msra.mxu0 0
    %334 = vmatprep.subr.bf16.mxu0 0
    %335 = vmatpush1.bf16.msra.mxu0 0
    %336 = vmatprep.subr.bf16.mxu0 0
    %337 = vmatpush1.bf16.msra.mxu0 0
    %338 = vmatprep.subr.bf16.mxu0 0
    %339 = vmatpush1.bf16.msra.mxu0 0
    %340 = vmatprep.subr.bf16.mxu0 0
    %341 = vmatpush1.bf16.msra.mxu0 0
    %342 = vmatprep.subr.bf16.mxu0 0
    %343 = vmatpush1.bf16.msra.mxu0 0
    %344 = vmatprep.subr.bf16.mxu0 0
    %345 = vmatpush1.bf16.msra.mxu0 0
    %346 = vmatprep.subr.bf16.mxu0 0
    %347 = vmatpush1.bf16.msra.mxu0 0
    %348 = vmatprep.subr.bf16.mxu0 0
    %349 = vmatpush1.bf16.msra.mxu0 0
    %350 = vmatprep.subr.bf16.mxu0 0
    %351 = vmatpush1.bf16.msra.mxu0 0
    %352 = vmatprep.subr.bf16.mxu0 0
    %353 = vmatpush1.bf16.msra.mxu0 0
    %354 = vmatprep.subr.bf16.mxu0 0
    %355 = vmatpush1.bf16.msra.mxu0 0
    %356 = vmatprep.mubr.bf16.mxu0 0
    %357 = vmatmul.mubr.bf16.gmra.mrb[0].mxu0 %v322
    %v358 = vpop.f32.mrb[0].mxu0
    %v359 = vadd.f32 0.0, %v358
    %v360 = vpop.f32.mrb[0].mxu0
    %v361 = vpop.f32.mrb[0].mxu0
    %v362 = vpop.f32.mrb[0].mxu0
    %363 = vdwg.mxu0
    %v368 = vunpack.c.l.b16 %v301
    %v369 = vunpack.c.l.b16 %v302
    %v370 = vunpack.c.l.b16 %v303
    %v371 = vunpack.c.l.b16 %v304
    %v372 = vpack.c.b16 %v369, %v368
    %v373 = vpack.c.b16 %v371, %v370
    %v377 = vsel %vm147, %v295, 0
    %379 = vmatprep.subr.bf16.mxu0 0
    %380 = vmatpush1.bf16.msra.mxu0 %v372
    %381 = vmatprep.subr.bf16.mxu0 0
    %382 = vmatpush1.bf16.msra.mxu0 %v373
    %383 = vmatprep.subr.bf16.mxu0 0
    %384 = vmatpush1.bf16.msra.mxu0 0
    %385 = vmatprep.subr.bf16.mxu0 0
    %386 = vmatpush1.bf16.msra.mxu0 0
    %387 = vmatprep.subr.bf16.mxu0 0
    %388 = vmatpush1.bf16.msra.mxu0 0
    %389 = vmatprep.subr.bf16.mxu0 0
    %390 = vmatpush1.bf16.msra.mxu0 0
    %391 = vmatprep.subr.bf16.mxu0 0
    %392 = vmatpush1.bf16.msra.mxu0 0
    %393 = vmatprep.subr.bf16.mxu0 0
    %394 = vmatpush1.bf16.msra.mxu0 0
    %395 = vmatprep.subr.bf16.mxu0 0
    %396 = vmatpush1.bf16.msra.mxu0 0
    %397 = vmatprep.subr.bf16.mxu0 0
    %398 = vmatpush1.bf16.msra.mxu0 0
    %399 = vmatprep.subr.bf16.mxu0 0
    %400 = vmatpush1.bf16.msra.mxu0 0
    %401 = vmatprep.subr.bf16.mxu0 0
    %402 = vmatpush1.bf16.msra.mxu0 0
    %403 = vmatprep.subr.bf16.mxu0 0
    %404 = vmatpush1.bf16.msra.mxu0 0
    %405 = vmatprep.subr.bf16.mxu0 0
    %406 = vmatpush1.bf16.msra.mxu0 0
    %407 = vmatprep.subr.bf16.mxu0 0
    %408 = vmatpush1.bf16.msra.mxu0 0
    %409 = vmatprep.subr.bf16.mxu0 0
    %410 = vmatpush1.bf16.msra.mxu0 0
    %411 = vmatprep.mubr.bf16.mxu0 0
    %412 = vmatmul.mubr.bf16.gmra.mrb[0].mxu0 %v377
    %v413 = vpop.f32.mrb[0].mxu0
    %v414 = vadd.f32 0.0, %v413
    %v415 = vpop.f32.mrb[0].mxu0
    %v416 = vpop.f32.mrb[0].mxu0
    %v417 = vpop.f32.mrb[0].mxu0
    %418 = vdwg.mxu0
    %v423 = vunpack.c.l.b16 %v305
    %v424 = vunpack.c.l.b16 %v306
    %v425 = vunpack.c.l.b16 %v307
    %v426 = vunpack.c.l.b16 %v308
    %v427 = vpack.c.b16 %v424, %v423
    %v428 = vpack.c.b16 %v426, %v425
    %431 = vmatprep.subr.bf16.mxu0 0
    %432 = vmatpush1.bf16.msra.mxu0 %v427
    %433 = vmatprep.subr.bf16.mxu0 0
    %434 = vmatpush1.bf16.msra.mxu0 %v428
    %435 = vmatprep.subr.bf16.mxu0 0
    %436 = vmatpush1.bf16.msra.mxu0 0
    %437 = vmatprep.subr.bf16.mxu0 0
    %438 = vmatpush1.bf16.msra.mxu0 0
    %439 = vmatprep.subr.bf16.mxu0 0
    %440 = vmatpush1.bf16.msra.mxu0 0
    %441 = vmatprep.subr.bf16.mxu0 0
    %442 = vmatpush1.bf16.msra.mxu0 0
    %443 = vmatprep.subr.bf16.mxu0 0
    %444 = vmatpush1.bf16.msra.mxu0 0
    %445 = vmatprep.subr.bf16.mxu0 0
    %446 = vmatpush1.bf16.msra.mxu0 0
    %447 = vmatprep.subr.bf16.mxu0 0
    %448 = vmatpush1.bf16.msra.mxu0 0
    %449 = vmatprep.subr.bf16.mxu0 0
    %450 = vmatpush1.bf16.msra.mxu0 0
    %451 = vmatprep.subr.bf16.mxu0 0
    %452 = vmatpush1.bf16.msra.mxu0 0
    %453 = vmatprep.subr.bf16.mxu0 0
    %454 = vmatpush1.bf16.msra.mxu0 0
    %455 = vmatprep.subr.bf16.mxu0 0
    %456 = vmatpush1.bf16.msra.mxu0 0
    %457 = vmatprep.subr.bf16.mxu0 0
    %458 = vmatpush1.bf16.msra.mxu0 0
    %459 = vmatprep.subr.bf16.mxu0 0
    %460 = vmatpush1.bf16.msra.mxu0 0
    %461 = vmatprep.subr.bf16.mxu0 0
    %462 = vmatpush1.bf16.msra.mxu0 0
    %463 = vmatprep.mubr.bf16.mxu0 0
    %464 = vmatmul.mubr.bf16.gmra.mrb[0].mxu0 %v322
    %v465 = vpop.f32.mrb[0].mxu0
    %v466 = vadd.f32 0.0, %v465
    %v467 = vpop.f32.mrb[0].mxu0
    %v468 = vpop.f32.mrb[0].mxu0
    %v469 = vpop.f32.mrb[0].mxu0
    %470 = vdwg.mxu0
    %v471 = vrot.slane %v359, 7
    %v472 = vsel %vm193, 0.0, %v471
    %v473 = vadd.f32 %v472, %v414
    %v474 = vadd.f32 %v473, %v466
    %v475 = vld [vmem:[%s4] sm:$0x1]
    %v477 = vlaneseq
    %v478 = vshrl.u32 %v477, 7
    %v479 = vsub.s32 0, %v478
    %v480 = vrot.slane %v475, %v479
    %v482 = vadd.f32 %v474, %v480
    %v483 = vsel %vm147, %v482, 0.0
    %484 = vadd.xlane.f32.xlu0 %v483
    %v485 = vpop.xlane.xlu0 %484
    %v486 = vrcp.pop 32.0
    %v487 = vmul.f32 %v485, %v486
    %v488 = vmul.f32 %v482, %v482
    %v489 = vsel %vm147, %v488, 0.0
    %490 = vadd.xlane.f32.xlu0 %v489
    %v491 = vpop.xlane.xlu0 %490
    %v492 = vmul.f32 %v491, %v486
    %v493 = vmul.f32 %v487, %v487
    %v494 = vsub.f32 %v492, %v493
    %v495 = vsub.f32 %v482, %v487
    %v496 = vadd.f32 %v494, 1e-05
    %v497 = vrsqrt.pop %v496
    %v498 = vmul.f32 %v495, %v497
    %v499 = vld [vmem:[%s5] sm:$0x1]
    %v501 = vlaneseq
    %v502 = vshrl.u32 %v501, 7
    %v503 = vsub.s32 0, %v502
    %v504 = vrot.slane %v499, %v503
    %v506 = vmul.f32 %v498, %v504
    %v507 = vld [vmem:[%s6] sm:$0x1]
    %v509 = vlaneseq
    %v510 = vshrl.u32 %v509, 7
    %v511 = vsub.s32 0, %v510
    %v512 = vrot.slane %v507, %v511
    %v514 = vadd.f32 %v506, %v512
    %515 = vst.msk [vmem:[#allocation2] sm:$0xff] %vm147, %v514
    // Predicated region
    $region30: #{tpu_custom_call.1} parent=1 // pred_check
      _
    $region31: #{tpu_custom_call.1} parent=1 // pred_check_branch
      %517 = sbr.rel (0) target = $region33
    $region32: #{tpu_custom_call.1} parent=1 // pred_region
      %s519 = ssub.s32 128, 128
      %520 = vsyncadd [#allocation3], %s519
      %s522 = sshll.u32 [#allocation2], 4
      %s523 = int_to_ptr.vmem [resolvable:$true] %s522
      %525 = dma.vmem_to_hbm [thread:$0]  %s523, 128, %s7, [#allocation3]
    $region33: #{tpu_custom_call.1} parent=1 // pred_fallthru
      _
    // Predicated region
    $region34: #{tpu_custom_call.1} parent=1 // pred_check
      _
    $region35: #{tpu_custom_call.1} parent=1 // pred_check_branch
      %527 = sbr.rel (0) target = $region37
    $region36: #{tpu_custom_call.1} parent=1 // pred_region
      %528 = dma.done [#allocation3], 128
    $region37: #{tpu_custom_call.1} parent=1 // pred_fallthru
      _
    %529 = vsyncpa [#allocation3], 1

</llo_original>
